<compile_context>
chip_gen: v6e
topology: v6e:2x2x1
jax: 0.10.0
libtpu: 0.0.40
codegen_flags: <defaults>
</compile_context>

<pallas_src>
import functools

import jax
import jax.numpy as jnp
import numpy as np
from jax import lax
from jax.experimental import pallas as pl
from jax.experimental.pallas import tpu as pltpu

_VMEM_LIMIT = 48 * 1024 * 1024  # safe on v5e/v6e (128 MiB) and v7x (64 MiB)


# ----------------------------------------------------------------------------
# Pallas kernel 1: M-tiled matmul + bias + LeakyReLU (conv1 after im2col)
# ----------------------------------------------------------------------------
def _matmul_bias_lrelu_kernel(a_ref, w_ref, b_ref, o_ref):
    # bf16 operands, f32 accumulation on the MXU, f32 epilogue.
    acc = jnp.dot(a_ref[...], w_ref[...], preferred_element_type=jnp.float32)
    acc = acc + b_ref[...]
    acc = jnp.where(acc > 0, acc, 0.2 * acc)
    o_ref[...] = acc.astype(o_ref.dtype)


def conv1_matmul(a, w, bias):
    """out = leaky_relu(A @ W + b).  A:(M,K) bf16, W:(K,128) bf16 -> (M,128) bf16."""
    M, K = a.shape
    K2, OC = w.shape
    assert K == K2

    tm = min(512, M)
    while M % tm:
        tm //= 2
    grid = (M // tm,)

    bias2d = bias.reshape(1, OC).astype(jnp.float32)

    return pl.pallas_call(
        _matmul_bias_lrelu_kernel,
        out_shape=jax.ShapeDtypeStruct((M, OC), jnp.bfloat16),
        grid=grid,
        in_specs=[
            pl.BlockSpec((tm, K), lambda i: (i, 0)),   # A tile streams over M
            pl.BlockSpec((K, OC), lambda i: (0, 0)),   # weights resident
            pl.BlockSpec((1, OC), lambda i: (0, 0)),   # bias resident
        ],
        out_specs=pl.BlockSpec((tm, OC), lambda i: (i, 0)),
        compiler_params=pltpu.CompilerParams(
            dimension_semantics=("parallel",),
            vmem_limit_bytes=_VMEM_LIMIT,
        ),
    )(a.astype(jnp.bfloat16), w.astype(jnp.bfloat16), bias2d)


# ----------------------------------------------------------------------------
# Pallas kernel 2: fused conv2-matmul + BatchNorm(train) + LeakyReLU + fc + sigmoid
# ----------------------------------------------------------------------------
def _conv2_bn_fc_kernel(a_ref, w_ref, b_ref, gamma_ref, beta_ref, fcw_ref,
                        fcb_ref, o_ref, *, n_batch, spatial):
    # conv2 as matmul (bf16 operands, f32 accumulation)
    h = jnp.dot(a_ref[...], w_ref[...], preferred_element_type=jnp.float32)  # (M,128)
    h = h + b_ref[...]

    # training-mode batch statistics over all rows (N * OH * OW), per channel
    mean = jnp.mean(h, axis=0, keepdims=True)
    var = jnp.mean((h - mean) ** 2, axis=0, keepdims=True)      # biased, like PyTorch fwd
    hn = (h - mean) * lax.rsqrt(var + 1e-5)
    y = hn * gamma_ref[...] + beta_ref[...]
    y = jnp.where(y > 0, y, 0.2 * y)                             # (M, 128) f32

    # fc + sigmoid as a VPU multiply + reductions (fc weight rows pre-permuted
    # on the host to NHWC order, shape (spatial, 128)).
    y3 = y.reshape(n_batch, spatial, y.shape[-1])                # (N, S, 128)
    z = y3 * fcw_ref[...]                                        # broadcast over N
    t = jnp.sum(z, axis=1)                                       # (N, 128)
    logits = jnp.sum(t, axis=1, keepdims=True) + fcb_ref[...]    # (N, 1)
    o_ref[...] = jax.nn.sigmoid(logits).astype(o_ref.dtype)


def conv2_bn_fc(a, w, bias, gamma, beta, fcw, fcb, *, n_batch, spatial):
    M, K = a.shape
    K2, C = w.shape
    assert K == K2 and M == n_batch * spatial

    vmem = pl.BlockSpec(memory_space=pltpu.MemorySpace.VMEM)
    kernel = functools.partial(_conv2_bn_fc_kernel, n_batch=n_batch, spatial=spatial)
    # Single block: BN batch statistics need the full (M, 128) slab, which at
    # these sizes comfortably fits VMEM.  At large scale this would switch to a
    # two-pass / grid-carried mean+var reduction.
    return pl.pallas_call(
        kernel,
        out_shape=jax.ShapeDtypeStruct((n_batch, 1), jnp.float32),
        in_specs=[vmem] * 7,
        out_specs=vmem,
        compiler_params=pltpu.CompilerParams(vmem_limit_bytes=_VMEM_LIMIT),
    )(a.astype(jnp.bfloat16),
      w.astype(jnp.bfloat16),
      bias.reshape(1, C).astype(jnp.float32),
      gamma.reshape(1, C).astype(jnp.float32),
      beta.reshape(1, C).astype(jnp.float32),
      fcw.astype(jnp.float32),
      fcb.reshape(1, 1).astype(jnp.float32))


# ----------------------------------------------------------------------------
# Glue: NHWC im2col (K axis flattened as (KH, KW, C) to match weight layout)
# ----------------------------------------------------------------------------
def im2col_nhwc(x, kh, kw, stride, pad):
    xp = jnp.pad(x, ((0, 0), (pad, pad), (pad, pad), (0, 0)))
    N, H, W, C = xp.shape
    oh = (H - kh) // stride + 1
    ow = (W - kw) // stride + 1
    cols = []
    for i in range(kh):
        for j in range(kw):
            cols.append(xp[:, i:i + stride * oh:stride, j:j + stride * ow:stride, :])
    patches = jnp.stack(cols, axis=3)              # (N, oh, ow, kh*kw, C)
    return patches.reshape(N * oh * ow, kh * kw * C), oh, ow


# ----------------------------------------------------------------------------
# One-time host-side weight re-layout (NHWC, padded, bf16 where appropriate)
# ----------------------------------------------------------------------------
def prepare_params(params, img_size):
    kh = kw = 4
    oc_pad = 128

    w1 = params["conv1_w"]                                  # (64, Cin, 4, 4) OIHW
    oc1, cin = w1.shape[0], w1.shape[1]
    w1m = w1.transpose(2, 3, 1, 0).reshape(kh * kw * cin, oc1)     # (K1, 64)
    w1m = jnp.pad(w1m, ((0, 0), (0, oc_pad - oc1)))                # pad OC 64 -> 128
    b1 = jnp.pad(params["conv1_b"], (0, oc_pad - oc1))

    w2 = params["conv2_w"]                                  # (128, 64, 4, 4) OIHW
    oc2 = w2.shape[0]
    w2m = w2.transpose(2, 3, 1, 0)                                 # (4, 4, 64, 128)
    w2m = jnp.pad(w2m, ((0, 0), (0, 0), (0, oc_pad - oc1), (0, 0)))  # pad K-channels
    w2m = w2m.reshape(kh * kw * oc_pad, oc2)                       # (2048, 128)

    s_side = img_size // 4
    fcw = params["fc_w"].reshape(oc2, s_side, s_side)              # PyTorch (C, H, W) order
    fcw = fcw.transpose(1, 2, 0).reshape(s_side * s_side, oc2)     # -> (S, 128) NHWC order

    return {
        "label_emb": params["label_emb"],
        "w1": w1m.astype(jnp.bfloat16), "b1": b1.astype(jnp.float32),
        "w2": w2m.astype(jnp.bfloat16), "b2": params["conv2_b"].astype(jnp.float32),
        "gamma": params["bn2_gamma"].astype(jnp.float32),
        "beta": params["bn2_beta"].astype(jnp.float32),
        "fcw": fcw.astype(jnp.float32), "fcb": params["fc_b"].astype(jnp.float32),
    }


# ----------------------------------------------------------------------------
# Discriminator forward (NHWC internally, NCHW external input like PyTorch)
# ----------------------------------------------------------------------------
def discriminator_forward(prep, x, labels, img_size):
    N = x.shape[0]

    # TODO(synk): embedding gather (data-dependent row gather) kept in plain JAX.
    lab = jnp.take(prep["label_emb"], labels, axis=0).reshape(N, img_size, img_size, 1)
    x_nhwc = jnp.transpose(x, (0, 2, 3, 1))              # one-time NCHW->NHWC of the input
    xin = jnp.concatenate([x_nhwc, lab], axis=-1)        # (N, H, W, Cin+1)

    # conv1 + leaky_relu: im2col glue + gridded Pallas matmul (OC padded to 128)
    a1, oh1, ow1 = im2col_nhwc(xin, 4, 4, 2, 1)
    h1 = conv1_matmul(a1, prep["w1"], prep["b1"])        # (N*oh1*ow1, 128) bf16
    h1 = h1.reshape(N, oh1, ow1, 128)                    # NHWC, no transpose

    # conv2 + BN + leaky_relu + fc + sigmoid: one fused Pallas kernel
    a2, oh2, ow2 = im2col_nhwc(h1, 4, 4, 2, 1)           # (N*oh2*ow2, 2048) bf16
    out = conv2_bn_fc(a2, prep["w2"], prep["b2"], prep["gamma"], prep["beta"],
                      prep["fcw"], prep["fcb"], n_batch=N, spatial=oh2 * ow2)
    return out                                           # (N, 1)


# ----------------------------------------------------------------------------
# Pure-JAX reference (f32, original PyTorch-layout params)
# ----------------------------------------------------------------------------
def discriminator_ref(params, x, labels, img_size):
    N = x.shape[0]
    lab = jnp.take(params["label_emb"], labels, axis=0).reshape(N, 1, img_size, img_size)
    x = jnp.concatenate([x, lab], axis=1)
    dn = ("NCHW", "OIHW", "NCHW")
    h = lax.conv_general_dilated(x, params["conv1_w"], (2, 2), [(1, 1), (1, 1)],
                                 dimension_numbers=dn)
    h = h + params["conv1_b"][None, :, None, None]
    h = jnp.where(h > 0, h, 0.2 * h)
    h = lax.conv_general_dilated(h, params["conv2_w"], (2, 2), [(1, 1), (1, 1)],
                                 dimension_numbers=dn)
    h = h + params["conv2_b"][None, :, None, None]
    mean = jnp.mean(h, axis=(0, 2, 3), keepdims=True)
    var = jnp.mean((h - mean) ** 2, axis=(0, 2, 3), keepdims=True)
    h = (h - mean) * lax.rsqrt(var + 1e-5)
    h = h * params["bn2_gamma"][None, :, None, None] + params["bn2_beta"][None, :, None, None]
    h = jnp.where(h > 0, h, 0.2 * h)
    h = h.reshape(N, -1)
    return jax.nn.sigmoid(h @ params["fc_w"].T + params["fc_b"][None, :])


# ----------------------------------------------------------------------------
# Main
# ----------------------------------------------------------------------------
if __name__ == "__main__":
    img_channels, img_size, num_classes = 3, 16, 10
    batch = 2
    feat = 128 * (img_size // 4) ** 2

    key = jax.random.PRNGKey(0)
    keys = jax.random.split(key, 11)
    params = {
        "label_emb": 0.1 * jax.random.normal(keys[0], (num_classes, img_size * img_size), jnp.float32),
        "conv1_w": 0.05 * jax.random.normal(keys[1], (64, img_channels + 1, 4, 4), jnp.float32),
        "conv1_b": 0.05 * jax.random.normal(keys[2], (64,), jnp.float32),
        "conv2_w": 0.05 * jax.random.normal(keys[3], (128, 64, 4, 4), jnp.float32),
        "conv2_b": 0.05 * jax.random.normal(keys[4], (128,), jnp.float32),
        "bn2_gamma": 1.0 + 0.05 * jax.random.normal(keys[5], (128,), jnp.float32),
        "bn2_beta": 0.05 * jax.random.normal(keys[6], (128,), jnp.float32),
        "fc_w": 0.05 * jax.random.normal(keys[7], (1, feat), jnp.float32),
        "fc_b": 0.05 * jax.random.normal(keys[8], (1,), jnp.float32),
    }

    x = jax.random.normal(keys[9], (batch, img_channels, img_size, img_size), jnp.float32)
    labels = jax.random.randint(keys[10], (batch,), 0, num_classes, jnp.int32)

    prep = prepare_params(params, img_size)

    out = discriminator_forward(prep, x, labels, img_size)
    out = jax.block_until_ready(out)

    ref = jax.block_until_ready(discriminator_ref(params, x, labels, img_size))
    # bf16 matmul operands with f32 accumulation -> looser tolerance than pure f32.
    np.testing.assert_allclose(np.asarray(out), np.asarray(ref), rtol=2e-2, atol=2e-2)

    assert out.shape == (batch, 1)
    print("KERNEL_OK")
</pallas_src>

<mosaic_0001>
module attributes {stable_mosaic.version = 11 : i64} {
  func.func @_matmul_bias_lrelu_kernel(%arg0: i32, %arg1: memref<128x64xbf16, #tpu.memory_space<vmem>>, %arg2: memref<64x128xbf16, #tpu.memory_space<vmem>>, %arg3: memref<1x128xf32, #tpu.memory_space<vmem>>, %arg4: memref<128x128xbf16, #tpu.memory_space<vmem>>) attributes {dimension_semantics = [#tpu.dimension_semantics<parallel>], iteration_bounds = array<i64: 1>, scalar_prefetch = 0 : i64, scratch_operands = 0 : i64, tpu.core_type = #tpu.core_type<tc>, window_params = [{transform_indices = @transform_0, window_bounds = array<i64: 128, 64>}, {pipeline_mode = #tpu.pipeline_mode<synchronous>, transform_indices = @transform_1, window_bounds = array<i64: 64, 128>}, {pipeline_mode = #tpu.pipeline_mode<synchronous>, transform_indices = @transform_2, window_bounds = array<i64: 1, 128>}, {transform_indices = @transform_3, window_bounds = array<i64: 128, 128>}]} {
    %c0 = arith.constant 0 : index
    %c0_0 = arith.constant 0 : index
    %0 = vector.load %arg1[%c0, %c0_0] : memref<128x64xbf16, #tpu.memory_space<vmem>>, vector<128x64xbf16>
    %c0_1 = arith.constant 0 : index
    %c0_2 = arith.constant 0 : index
    %1 = vector.load %arg2[%c0_1, %c0_2] : memref<64x128xbf16, #tpu.memory_space<vmem>>, vector<64x128xbf16>
    %cst = arith.constant dense<0.000000e+00> : vector<128x128xf32>
    %2 = tpu.matmul %0, %1, %cst {dimension_numbers = #tpu.dot_dimension_numbers<[1], [0], [0], [1], [0, 0, 1, 1], [], []>} : vector<128x64xbf16>, vector<64x128xbf16>, vector<128x128xf32> -> vector<128x128xf32>
    %c0_3 = arith.constant 0 : index
    %c0_4 = arith.constant 0 : index
    %3 = vector.load %arg3[%c0_3, %c0_4] : memref<1x128xf32, #tpu.memory_space<vmem>>, vector<1x128xf32>
    %4 = vector.broadcast %3 : vector<1x128xf32> to vector<128x128xf32>
    %5 = arith.addf %2, %4 : vector<128x128xf32>
    %cst_5 = arith.constant 0.000000e+00 : f32
    %6 = vector.broadcast %cst_5 : f32 to vector<128x128xf32>
    %7 = arith.cmpf ogt, %5, %6 : vector<128x128xf32>
    %cst_6 = arith.constant 2.000000e-01 : f32
    %8 = vector.broadcast %cst_6 : f32 to vector<128x128xf32>
    %9 = arith.mulf %8, %5 : vector<128x128xf32>
    %10 = arith.select %7, %5, %9 : vector<128x128xi1>, vector<128x128xf32>
    %11 = arith.truncf %10 : vector<128x128xf32> to vector<128x128xbf16>
    %c0_7 = arith.constant 0 : index
    %c0_8 = arith.constant 0 : index
    %12 = vector.load %arg4[%c0_7, %c0_8] : memref<128x128xbf16, #tpu.memory_space<vmem>>, vector<128x128xbf16>
    tpu.vector_store %arg4[%c0_7, %c0_8], %11 {strides = array<i32>} : memref<128x128xbf16, #tpu.memory_space<vmem>>, vector<128x128xbf16>,
    return
  }
  func.func @transform_0(%arg0: i32) -> (i32, i32) {
    %c0_i32 = arith.constant 0 : i32
    %c0_i32_0 = arith.constant 0 : i32
    return %arg0, %c0_i32 : i32, i32
  }
  func.func @transform_1(%arg0: i32) -> (i32, i32) {
    %c0_i32 = arith.constant 0 : i32
    %c0_i32_0 = arith.constant 0 : i32
    %c0_i32_1 = arith.constant 0 : i32
    return %c0_i32, %c0_i32_0 : i32, i32
  }
  func.func @transform_2(%arg0: i32) -> (i32, i32) {
    %c0_i32 = arith.constant 0 : i32
    %c0_i32_0 = arith.constant 0 : i32
    %c0_i32_1 = arith.constant 0 : i32
    return %c0_i32, %c0_i32_0 : i32, i32
  }
  func.func @transform_3(%arg0: i32) -> (i32, i32) {
    %c0_i32 = arith.constant 0 : i32
    %c0_i32_0 = arith.constant 0 : i32
    return %arg0, %c0_i32 : i32, i32
  }
}

</mosaic_0001>

<llo_original>
// kernel: tpu_custom_call.1
$region0: #{tpu_custom_call.1}
  #allocation0 [shape = 'u32[]', space=smem, size = 0x4, offset = 0x4, fixed_abs, tag = 'smem constant byte address 0x4 - core index']
  #allocation1 [shape = 'u32[144,128]{1,0:T(1,128)}', space=vmem, size = 0x12000, scoped, tag = 'internal scratch']
  %s0 = inlined_call_operand.vmem [shape: bf16[128,64], index: 0, kind: input, shape index: {}]
  %s1 = inlined_call_operand.vmem [shape: bf16[64,128], index: 1, kind: input, shape index: {}]
  %s2 = inlined_call_operand.vmem [shape: f32[1,128], index: 2, kind: input, shape index: {}]
  %s3 = inlined_call_operand.hbm [shape: bf16[128,128], index: 3, kind: output, shape index: {}]
  %s4 = sld [smem:[#allocation0]]
  $region22: #{tpu_custom_call.1} parent=0
    _
  %s6 = ssub.s32 1, %s4
  %s7 = scalar_select 0, %s6, %s4
  $region1: #{tpu_custom_call.1} parent=0
    #allocation2 [shape = 'u8[32768]{0}', space=vmem, size = 0x8000, scoped, tag = 'output window, operand 0, single buffered']
    #allocation3 [shape = 's32[1]{0}', space=sflag, size = 0x4, scoped, tag = 'scoped memory for tpu_custom_call.1']
    %8 = vsyncpa [#allocation3], 0
    // Predicated region
    $region2: #{tpu_custom_call.1} parent=1 // pred_check
      _
    $region3: #{tpu_custom_call.1} parent=1 // pred_check_branch
      %10 = sbr.rel (0) target = $region5
    $region4: #{tpu_custom_call.1} parent=1 // pred_region
      _
    $region5: #{tpu_custom_call.1} parent=1 // pred_fallthru
      _
    // Predicated region
    $region6: #{tpu_custom_call.1} parent=1 // pred_check
      _
    $region7: #{tpu_custom_call.1} parent=1 // pred_check_branch
      %12 = sbr.rel (0) target = $region9
    $region8: #{tpu_custom_call.1} parent=1 // pred_region
      _
    $region9: #{tpu_custom_call.1} parent=1 // pred_fallthru
      _
    // Predicated region
    $region10: #{tpu_custom_call.1} parent=1 // pred_check
      _
    $region11: #{tpu_custom_call.1} parent=1 // pred_check_branch
      %14 = sbr.rel (0) target = $region13
    $region12: #{tpu_custom_call.1} parent=1 // pred_region
      _
    $region13: #{tpu_custom_call.1} parent=1 // pred_fallthru
      _
    %v16 = vld [vmem:[%s0] sm:$0xf]
    %v17 = vld [vmem:[%s0 + $0x4] sm:$0xf]
    %v18 = vld [vmem:[%s0 + $0x8] sm:$0xf]
    %v19 = vld [vmem:[%s0 + $0xc] sm:$0xf]
    %v20 = vld [vmem:[%s0 + $0x10] sm:$0xf]
    %v21 = vld [vmem:[%s0 + $0x14] sm:$0xf]
    %v22 = vld [vmem:[%s0 + $0x18] sm:$0xf]
    %v23 = vld [vmem:[%s0 + $0x1c] sm:$0xf]
    %v24 = vld [vmem:[%s0 + $0x20] sm:$0xf]
    %v25 = vld [vmem:[%s0 + $0x24] sm:$0xf]
    %v26 = vld [vmem:[%s0 + $0x28] sm:$0xf]
    %v27 = vld [vmem:[%s0 + $0x2c] sm:$0xf]
    %v28 = vld [vmem:[%s0 + $0x30] sm:$0xf]
    %v29 = vld [vmem:[%s0 + $0x34] sm:$0xf]
    %v30 = vld [vmem:[%s0 + $0x38] sm:$0xf]
    %v31 = vld [vmem:[%s0 + $0x3c] sm:$0xf]
    %v32 = vld [vmem:[%s1] sm:$0xf]
    %v33 = vld [vmem:[%s1 + $0x4] sm:$0xf]
    %v34 = vld [vmem:[%s1 + $0x8] sm:$0xf]
    %v35 = vld [vmem:[%s1 + $0xc] sm:$0xf]
    %v36 = vld [vmem:[%s1 + $0x10] sm:$0xf]
    %v37 = vld [vmem:[%s1 + $0x14] sm:$0xf]
    %v38 = vld [vmem:[%s1 + $0x18] sm:$0xf]
    %v39 = vld [vmem:[%s1 + $0x1c] sm:$0xf]
    %v40 = vld [vmem:[%s2] sm:$0x1]
    %v42 = vlaneseq
    %v43 = vshrl.u32 %v42, 7
    %v44 = vsub.s32 0, %v43
    %v45 = vrot.slane %v40, %v44
    %v63 = vunpack.c.l.b16 %v16
    %v64 = vunpack.c.l.b16 %v17
    %v65 = vunpack.c.l.b16 %v18
    %v66 = vunpack.c.l.b16 %v19
    %v67 = vunpack.c.l.b16 %v20
    %v68 = vunpack.c.l.b16 %v21
    %v69 = vunpack.c.l.b16 %v22
    %v70 = vunpack.c.l.b16 %v23
    %v71 = vunpack.c.l.b16 %v24
    %v72 = vunpack.c.l.b16 %v25
    %v73 = vunpack.c.l.b16 %v26
    %v74 = vunpack.c.l.b16 %v27
    %v75 = vunpack.c.l.b16 %v28
    %v76 = vunpack.c.l.b16 %v29
    %v77 = vunpack.c.l.b16 %v30
    %v78 = vunpack.c.l.b16 %v31
    %v79 = vpack.c.b16 %v64, %v63
    %v80 = vpack.c.b16 %v66, %v65
    %v81 = vpack.c.b16 %v68, %v67
    %v82 = vpack.c.b16 %v70, %v69
    %v83 = vpack.c.b16 %v72, %v71
    %v84 = vpack.c.b16 %v74, %v73
    %v85 = vpack.c.b16 %v76, %v75
    %v86 = vpack.c.b16 %v78, %v77
    %v95 = vunpack.c.l.b16 %v32
    %v96 = vunpack.c.l.b16 %v33
    %v97 = vunpack.c.l.b16 %v34
    %v98 = vunpack.c.l.b16 %v35
    %v99 = vunpack.c.l.b16 %v36
    %v100 = vunpack.c.l.b16 %v37
    %v101 = vunpack.c.l.b16 %v38
    %v102 = vunpack.c.l.b16 %v39
    %v103 = vpack.c.b16 %v96, %v95
    %v104 = vpack.c.b16 %v98, %v97
    %v105 = vpack.c.b16 %v100, %v99
    %v106 = vpack.c.b16 %v102, %v101
    %vm111 = vcmask 523264
    %v113 = vsel %vm111, %v79, 0
    %v116 = vsel %vm111, %v80, 0
    %v119 = vsel %vm111, %v81, 0
    %v122 = vsel %vm111, %v82, 0
    %v125 = vsel %vm111, %v83, 0
    %v128 = vsel %vm111, %v84, 0
    %v131 = vsel %vm111, %v85, 0
    %v134 = vsel %vm111, %v86, 0
    %136 = vmatprep.subr.bf16.mxu0 0
    %137 = vmatpush1.bf16.msra.mxu0 0
    %138 = vmatprep.subr.bf16.mxu0 0
    %139 = vmatpush1.bf16.msra.mxu0 0
    %140 = vmatprep.subr.bf16.mxu0 0
    %141 = vmatpush1.bf16.msra.mxu0 0
    %142 = vmatprep.subr.bf16.mxu0 0
    %143 = vmatpush1.bf16.msra.mxu0 0
    %144 = vmatprep.subr.bf16.mxu0 0
    %145 = vmatpush1.bf16.msra.mxu0 %v106
    %146 = vmatprep.subr.bf16.mxu0 0
    %147 = vmatpush1.bf16.msra.mxu0 %v105
    %148 = vmatprep.subr.bf16.mxu0 0
    %149 = vmatpush1.bf16.msra.mxu0 %v104
    %150 = vmatprep.subr.bf16.mxu0 0
    %151 = vmatpush1.bf16.msra.mxu0 %v103
    %152 = vmatprep.subr.bf16.mxu0 0
    %153 = vmatpush2.bf16.msra.mxu0 0
    %154 = vmatprep.subr.bf16.mxu0 0
    %155 = vmatpush2.bf16.msra.mxu0 0
    %156 = vmatprep.subr.bf16.mxu0 0
    %157 = vmatpush2.bf16.msra.mxu0 0
    %158 = vmatprep.subr.bf16.mxu0 0
    %159 = vmatpush2.bf16.msra.mxu0 0
    %160 = vmatprep.subr.bf16.mxu0 0
    %161 = vmatpush2.bf16.msra.mxu0 0
    %162 = vmatprep.subr.bf16.mxu0 0
    %163 = vmatpush2.bf16.msra.mxu0 0
    %164 = vmatprep.subr.bf16.mxu0 0
    %165 = vmatpush2.bf16.msra.mxu0 0
    %166 = vmatprep.subr.bf16.mxu0 0
    %167 = vmatpush2.bf16.msra.mxu0 0
    %168 = vmatprep.mubr.bf16.mxu0 0
    %169 = vmatmul.mubr.bf16.gmra.mxu0 %v113
    %v170 = vpop.f32.mrf.mxu0
    %v171 = vadd.f32 %v45, %v170
    %v172 = vpop.f32.mrf.mxu0
    %v173 = vpop.f32.mrf.mxu0
    %v174 = vadd.f32 %v45, %v173
    %v175 = vpop.f32.mrf.mxu0
    %176 = vmatprep.mubr.bf16.mxu0 0
    %177 = vmatmul.mubr.bf16.gmra.mxu0 %v116
    %v178 = vpop.f32.mrf.mxu0
    %v179 = vadd.f32 %v45, %v178
    %v180 = vpop.f32.mrf.mxu0
    %v181 = vpop.f32.mrf.mxu0
    %v182 = vadd.f32 %v45, %v181
    %v183 = vpop.f32.mrf.mxu0
    %184 = vmatprep.mubr.bf16.mxu0 0
    %185 = vmatmul.mubr.bf16.gmra.mxu0 %v119
    %v186 = vpop.f32.mrf.mxu0
    %v187 = vadd.f32 %v45, %v186
    %v188 = vpop.f32.mrf.mxu0
    %v189 = vpop.f32.mrf.mxu0
    %v190 = vadd.f32 %v45, %v189
    %v191 = vpop.f32.mrf.mxu0
    %192 = vmatprep.mubr.bf16.mxu0 0
    %193 = vmatmul.mubr.bf16.gmra.mxu0 %v122
    %v194 = vpop.f32.mrf.mxu0
    %v195 = vadd.f32 %v45, %v194
    %v196 = vpop.f32.mrf.mxu0
    %v197 = vpop.f32.mrf.mxu0
    %v198 = vadd.f32 %v45, %v197
    %v199 = vpop.f32.mrf.mxu0
    %200 = vmatprep.mubr.bf16.mxu0 0
    %201 = vmatmul.mubr.bf16.gmra.mxu0 %v125
    %v202 = vpop.f32.mrf.mxu0
    %v203 = vadd.f32 %v45, %v202
    %v204 = vpop.f32.mrf.mxu0
    %v205 = vpop.f32.mrf.mxu0
    %v206 = vadd.f32 %v45, %v205
    %v207 = vpop.f32.mrf.mxu0
    %208 = vmatprep.mubr.bf16.mxu0 0
    %209 = vmatmul.mubr.bf16.gmra.mxu0 %v128
    %v210 = vpop.f32.mrf.mxu0
    %v211 = vadd.f32 %v45, %v210
    %v212 = vpop.f32.mrf.mxu0
    %v213 = vpop.f32.mrf.mxu0
    %v214 = vadd.f32 %v45, %v213
    %v215 = vpop.f32.mrf.mxu0
    %216 = vmatprep.mubr.bf16.mxu0 0
    %217 = vmatmul.mubr.bf16.gmra.mxu0 %v131
    %v218 = vpop.f32.mrf.mxu0
    %v219 = vadd.f32 %v45, %v218
    %v220 = vpop.f32.mrf.mxu0
    %v221 = vpop.f32.mrf.mxu0
    %v222 = vadd.f32 %v45, %v221
    %v223 = vpop.f32.mrf.mxu0
    %224 = vmatprep.mubr.bf16.mxu0 0
    %225 = vmatmul.mubr.bf16.gmra.mxu0 %v134
    %v226 = vpop.f32.mrf.mxu0
    %v227 = vadd.f32 %v45, %v226
    %v228 = vpop.f32.mrf.mxu0
    %v229 = vpop.f32.mrf.mxu0
    %v230 = vadd.f32 %v45, %v229
    %v231 = vpop.f32.mrf.mxu0
    %232 = vdwg.mxu0
    %vm233 = vcmp.gt.f32.partialorder %v171, 0.0
    %vm234 = vcmp.gt.f32.partialorder %v174, 0.0
    %vm235 = vcmp.gt.f32.partialorder %v179, 0.0
    %vm236 = vcmp.gt.f32.partialorder %v182, 0.0
    %vm237 = vcmp.gt.f32.partialorder %v187, 0.0
    %vm238 = vcmp.gt.f32.partialorder %v190, 0.0
    %vm239 = vcmp.gt.f32.partialorder %v195, 0.0
    %vm240 = vcmp.gt.f32.partialorder %v198, 0.0
    %vm241 = vcmp.gt.f32.partialorder %v203, 0.0
    %vm242 = vcmp.gt.f32.partialorder %v206, 0.0
    %vm243 = vcmp.gt.f32.partialorder %v211, 0.0
    %vm244 = vcmp.gt.f32.partialorder %v214, 0.0
    %vm245 = vcmp.gt.f32.partialorder %v219, 0.0
    %vm246 = vcmp.gt.f32.partialorder %v222, 0.0
    %vm247 = vcmp.gt.f32.partialorder %v227, 0.0
    %vm248 = vcmp.gt.f32.partialorder %v230, 0.0
    %v249 = vmul.f32 %v171, 0.2
    %v250 = vmul.f32 %v174, 0.2
    %v251 = vmul.f32 %v179, 0.2
    %v252 = vmul.f32 %v182, 0.2
    %v253 = vmul.f32 %v187, 0.2
    %v254 = vmul.f32 %v190, 0.2
    %v255 = vmul.f32 %v195, 0.2
    %v256 = vmul.f32 %v198, 0.2
    %v257 = vmul.f32 %v203, 0.2
    %v258 = vmul.f32 %v206, 0.2
    %v259 = vmul.f32 %v211, 0.2
    %v260 = vmul.f32 %v214, 0.2
    %v261 = vmul.f32 %v219, 0.2
    %v262 = vmul.f32 %v222, 0.2
    %v263 = vmul.f32 %v227, 0.2
    %v264 = vmul.f32 %v230, 0.2
    %v265 = vsel %vm233, %v171, %v249
    %v266 = vsel %vm234, %v174, %v250
    %v267 = vsel %vm235, %v179, %v251
    %v268 = vsel %vm236, %v182, %v252
    %v269 = vsel %vm237, %v187, %v253
    %v270 = vsel %vm238, %v190, %v254
    %v271 = vsel %vm239, %v195, %v255
    %v272 = vsel %vm240, %v198, %v256
    %v273 = vsel %vm241, %v203, %v257
    %v274 = vsel %vm242, %v206, %v258
    %v275 = vsel %vm243, %v211, %v259
    %v276 = vsel %vm244, %v214, %v260
    %v277 = vsel %vm245, %v219, %v261
    %v278 = vsel %vm246, %v222, %v262
    %v279 = vsel %vm247, %v227, %v263
    %v280 = vsel %vm248, %v230, %v264
    %v281 = vpack.c.bf16 %v266, %v265
    %v282 = vpack.c.bf16 %v268, %v267
    %v283 = vpack.c.bf16 %v270, %v269
    %v284 = vpack.c.bf16 %v272, %v271
    %v285 = vpack.c.bf16 %v274, %v273
    %v286 = vpack.c.bf16 %v276, %v275
    %v287 = vpack.c.bf16 %v278, %v277
    %v288 = vpack.c.bf16 %v280, %v279
    %v297 = vunpack.c.l.b16 %v281
    %v298 = vunpack.c.h.b16 %v281
    %v299 = vunpack.c.l.b16 %v282
    %v300 = vunpack.c.h.b16 %v282
    %v301 = vunpack.c.l.b16 %v283
    %v302 = vunpack.c.h.b16 %v283
    %v303 = vunpack.c.l.b16 %v284
    %v304 = vunpack.c.h.b16 %v284
    %v305 = vunpack.c.l.b16 %v285
    %v306 = vunpack.c.h.b16 %v285
    %v307 = vunpack.c.l.b16 %v286
    %v308 = vunpack.c.h.b16 %v286
    %v309 = vunpack.c.l.b16 %v287
    %v310 = vunpack.c.h.b16 %v287
    %v311 = vunpack.c.l.b16 %v288
    %v312 = vunpack.c.h.b16 %v288
    %v313 = vpack.c.b16 %v297, %v297
    %v314 = vpack.c.b16 %v298, %v298
    %v315 = vpack.c.b16 %v299, %v299
    %v316 = vpack.c.b16 %v300, %v300
    %v317 = vpack.c.b16 %v301, %v301
    %v318 = vpack.c.b16 %v302, %v302
    %v319 = vpack.c.b16 %v303, %v303
    %v320 = vpack.c.b16 %v304, %v304
    %v321 = vpack.c.b16 %v305, %v305
    %v322 = vpack.c.b16 %v306, %v306
    %v323 = vpack.c.b16 %v307, %v307
    %v324 = vpack.c.b16 %v308, %v308
    %v325 = vpack.c.b16 %v309, %v309
    %v326 = vpack.c.b16 %v310, %v310
    %v327 = vpack.c.b16 %v311, %v311
    %v328 = vpack.c.b16 %v312, %v312
    %345 = vst [vmem:[#allocation2] sm:$0xf] %v313
    %346 = vst [vmem:[#allocation2 + $0x4] sm:$0xf] %v314
    %347 = vst [vmem:[#allocation2 + $0x8] sm:$0xf] %v315
    %348 = vst [vmem:[#allocation2 + $0xc] sm:$0xf] %v316
    %349 = vst [vmem:[#allocation2 + $0x10] sm:$0xf] %v317
    %350 = vst [vmem:[#allocation2 + $0x14] sm:$0xf] %v318
    %351 = vst [vmem:[#allocation2 + $0x18] sm:$0xf] %v319
    %352 = vst [vmem:[#allocation2 + $0x1c] sm:$0xf] %v320
    %353 = vst [vmem:[#allocation2 + $0x20] sm:$0xf] %v321
    %354 = vst [vmem:[#allocation2 + $0x24] sm:$0xf] %v322
    %355 = vst [vmem:[#allocation2 + $0x28] sm:$0xf] %v323
    %356 = vst [vmem:[#allocation2 + $0x2c] sm:$0xf] %v324
    %357 = vst [vmem:[#allocation2 + $0x30] sm:$0xf] %v325
    %358 = vst [vmem:[#allocation2 + $0x34] sm:$0xf] %v326
    %359 = vst [vmem:[#allocation2 + $0x38] sm:$0xf] %v327
    %360 = vst [vmem:[#allocation2 + $0x3c] sm:$0xf] %v328
    // Predicated region
    $region14: #{tpu_custom_call.1} parent=1 // pred_check
      _
    $region15: #{tpu_custom_call.1} parent=1 // pred_check_branch
      %362 = sbr.rel (0) target = $region17
    $region16: #{tpu_custom_call.1} parent=1 // pred_region
      %s364 = ssub.s32 1024, 1024
      %365 = vsyncadd [#allocation3], %s364
      %s366 = sshll.u32 [#allocation2], 4
      %s367 = int_to_ptr.vmem [resolvable:$true] %s366
      %372 = dma.vmem_to_hbm [thread:$0]  %s367, 1024, %s3, [#allocation3], 64, 64, 4
    $region17: #{tpu_custom_call.1} parent=1 // pred_fallthru
      _
    // Predicated region
    $region18: #{tpu_custom_call.1} parent=1 // pred_check
      _
    $region19: #{tpu_custom_call.1} parent=1 // pred_check_branch
      %374 = sbr.rel (0) target = $region21
    $region20: #{tpu_custom_call.1} parent=1 // pred_region
      %375 = dma.done [#allocation3], 1024
    $region21: #{tpu_custom_call.1} parent=1 // pred_fallthru
      _
    %376 = vsyncpa [#allocation3], 1

</llo_original>
